<compile_context>
chip_gen: v5e
topology: v5e:2x2
jax: 0.10.0
libtpu: 0.0.40
codegen_flags: <defaults>
</compile_context>

<pallas_src>
import jax
import jax.numpy as jnp
from jax.experimental import pallas as pl
from jax.experimental.pallas import tpu as pltpu

LN_EPS = 1e-5


def _round_up(a: int, b: int) -> int:
    return (a + b - 1) // b * b


def _make_kernel(h_real: int, h_pad: int):
    """Kernel closure over the real / padded feature sizes (static)."""
    inv_h = 1.0 / float(h_real)

    def kernel(x_ref, g_ref, b_ref, wd_ref, bd_ref, wu_ref, bu_ref, o_ref):
        x_in = x_ref[...]                       # (tm, Hp) in input dtype
        xf = x_in.astype(jnp.float32)

        # LayerNorm statistics in f32 over the *real* feature lanes only.
        mean = jnp.sum(xf, axis=-1, keepdims=True) * inv_h
        centered = xf - mean
        if h_pad != h_real:
            lane = jax.lax.broadcasted_iota(jnp.int32, centered.shape, 1)
            c_var = jnp.where(lane < h_real, centered, 0.0)
        else:
            c_var = centered
        var = jnp.sum(c_var * c_var, axis=-1, keepdims=True) * inv_h
        # gamma/beta are zero-padded, so padded lanes of xn are exactly 0.
        xn = centered * jax.lax.rsqrt(var + LN_EPS) * g_ref[...] + b_ref[...]

        # down projection (+bias) and ReLU; feed MXU in the weight dtype.
        h = jnp.dot(xn.astype(wd_ref.dtype), wd_ref[...],
                    preferred_element_type=jnp.float32) + bd_ref[...]
        h = jnp.maximum(h, 0.0)

        # up projection (+bias) and residual add.
        y = jnp.dot(h.astype(wu_ref.dtype), wu_ref[...],
                    preferred_element_type=jnp.float32) + bu_ref[...]
        o_ref[...] = (y + xf).astype(o_ref.dtype)

    return kernel


def residual_adapter(x, gamma, beta, w_down, b_down, w_up, b_up, *, tm=256):
    """Fused ResidualAdapter forward.

    x: (..., H).  gamma/beta: (H,).  w_down: (H, Bn) ("x @ W" layout, i.e.
    transpose of nn.Linear.weight).  b_down: (Bn,).  w_up: (Bn, H).  b_up: (H,).
    Returns same shape/dtype as x.
    """
    orig_shape = x.shape
    H = orig_shape[-1]
    Bn = w_down.shape[1]
    x2 = x.reshape(-1, H)
    N = x2.shape[0]

    # Lane-dense padded feature sizes (multiples of 128).
    Hp = _round_up(H, 128)
    Bp = _round_up(Bn, 128)

    # Row tile: multiple of 8 (sublane), no bigger than needed; rows padded to
    # a whole number of tiles.
    tm = max(8, _round_up(min(tm, N), 8))
    Np = _round_up(N, tm)

    f32 = jnp.float32
    x_p = jnp.pad(x2, ((0, Np - N), (0, Hp - H)))
    g_p = jnp.pad(gamma.astype(f32), (0, Hp - H)).reshape(1, Hp)
    b_p = jnp.pad(beta.astype(f32), (0, Hp - H)).reshape(1, Hp)
    wd_p = jnp.pad(w_down, ((0, Hp - H), (0, Bp - Bn)))
    bd_p = jnp.pad(b_down.astype(f32), (0, Bp - Bn)).reshape(1, Bp)
    wu_p = jnp.pad(w_up, ((0, Bp - Bn), (0, Hp - H)))
    bu_p = jnp.pad(b_up.astype(f32), (0, Hp - H)).reshape(1, Hp)

    grid = (Np // tm,)

    cost = pl.CostEstimate(
        flops=int(4 * Np * Hp * Bp + 10 * Np * Hp),
        transcendentals=int(Np),
        bytes_accessed=int(2 * x_p.size * x_p.dtype.itemsize
                           + wd_p.size * wd_p.dtype.itemsize
                           + wu_p.size * wu_p.dtype.itemsize
                           + 4 * (g_p.size + b_p.size + bd_p.size + bu_p.size)),
    )

    out = pl.pallas_call(
        _make_kernel(H, Hp),
        out_shape=jax.ShapeDtypeStruct((Np, Hp), x.dtype),
        grid_spec=pltpu.PrefetchScalarGridSpec(
            num_scalar_prefetch=0,
            grid=grid,
            in_specs=[
                pl.BlockSpec((tm, Hp), lambda i: (i, 0)),   # x row tile
                pl.BlockSpec((1, Hp), lambda i: (0, 0)),    # gamma
                pl.BlockSpec((1, Hp), lambda i: (0, 0)),    # beta
                pl.BlockSpec((Hp, Bp), lambda i: (0, 0)),   # w_down
                pl.BlockSpec((1, Bp), lambda i: (0, 0)),    # b_down
                pl.BlockSpec((Bp, Hp), lambda i: (0, 0)),   # w_up
                pl.BlockSpec((1, Hp), lambda i: (0, 0)),    # b_up
            ],
            out_specs=pl.BlockSpec((tm, Hp), lambda i: (i, 0)),
        ),
        compiler_params=pltpu.CompilerParams(
            dimension_semantics=("parallel",)),
        cost_estimate=cost,
    )(x_p, g_p, b_p, wd_p, bd_p, wu_p, bu_p)

    return out[:N, :H].reshape(orig_shape)


def make_params(hidden_sz, projection_factor=3.2, key=jax.random.PRNGKey(0)):
    # bottleneck size computed exactly as in the PyTorch __init__
    bottleneck_sz = int(hidden_sz / projection_factor)
    bottleneck_sz = bottleneck_sz + (8 - bottleneck_sz % 8)

    k1, k2, k3, k4 = jax.random.split(key, 4)
    bound_d = 1.0 / jnp.sqrt(hidden_sz)
    bound_u = 1.0 / jnp.sqrt(bottleneck_sz)
    params = dict(
        gamma=jnp.ones((hidden_sz,), jnp.float32),
        beta=jnp.zeros((hidden_sz,), jnp.float32),
        w_down=jax.random.uniform(k1, (hidden_sz, bottleneck_sz), jnp.float32,
                                  -bound_d, bound_d),
        b_down=jax.random.uniform(k2, (bottleneck_sz,), jnp.float32,
                                  -bound_d, bound_d),
        w_up=jax.random.uniform(k3, (bottleneck_sz, hidden_sz), jnp.float32,
                                -bound_u, bound_u),
        b_up=jax.random.uniform(k4, (hidden_sz,), jnp.float32,
                                -bound_u, bound_u),
    )
    return params, bottleneck_sz


def reference(x, p):
    # pure-JAX reference for correctness check
    mean = jnp.mean(x, axis=-1, keepdims=True)
    var = jnp.mean((x - mean) ** 2, axis=-1, keepdims=True)
    xn = (x - mean) / jnp.sqrt(var + LN_EPS)
    xn = xn * p["gamma"] + p["beta"]
    h = jnp.maximum(xn @ p["w_down"] + p["b_down"], 0.0)
    y = h @ p["w_up"] + p["b_up"]
    return y + x


if __name__ == "__main__":
    hidden_sz = 32
    batch, seq = 2, 8

    key = jax.random.PRNGKey(0)
    kx, kp = jax.random.split(key)
    x = jax.random.normal(kx, (batch, seq, hidden_sz), jnp.float32)
    params, bottleneck_sz = make_params(hidden_sz, key=kp)

    out = residual_adapter(x, params["gamma"], params["beta"],
                           params["w_down"], params["b_down"],
                           params["w_up"], params["b_up"])
    out = jax.block_until_ready(out)

    ref = reference(x, params)
    assert out.shape == x.shape and out.dtype == x.dtype
    assert jnp.allclose(out, ref, atol=1e-5, rtol=1e-5), "mismatch vs reference"
    print("KERNEL_OK")
</pallas_src>

<mosaic_0001>
module attributes {stable_mosaic.version = 11 : i64} {
  func.func @kernel(%arg0: i32, %arg1: memref<16x128xf32, #tpu.memory_space<vmem>>, %arg2: memref<1x128xf32, #tpu.memory_space<vmem>>, %arg3: memref<1x128xf32, #tpu.memory_space<vmem>>, %arg4: memref<128x128xf32, #tpu.memory_space<vmem>>, %arg5: memref<1x128xf32, #tpu.memory_space<vmem>>, %arg6: memref<128x128xf32, #tpu.memory_space<vmem>>, %arg7: memref<1x128xf32, #tpu.memory_space<vmem>>, %arg8: memref<16x128xf32, #tpu.memory_space<vmem>>) attributes {dimension_semantics = [#tpu.dimension_semantics<parallel>], iteration_bounds = array<i64: 1>, scalar_prefetch = 0 : i64, scratch_operands = 0 : i64, tpu.core_type = #tpu.core_type<tc>, window_params = [{transform_indices = @transform_0, window_bounds = array<i64: 16, 128>}, {pipeline_mode = #tpu.pipeline_mode<synchronous>, transform_indices = @transform_1, window_bounds = array<i64: 1, 128>}, {pipeline_mode = #tpu.pipeline_mode<synchronous>, transform_indices = @transform_2, window_bounds = array<i64: 1, 128>}, {pipeline_mode = #tpu.pipeline_mode<synchronous>, transform_indices = @transform_3, window_bounds = array<i64: 128, 128>}, {pipeline_mode = #tpu.pipeline_mode<synchronous>, transform_indices = @transform_4, window_bounds = array<i64: 1, 128>}, {pipeline_mode = #tpu.pipeline_mode<synchronous>, transform_indices = @transform_5, window_bounds = array<i64: 128, 128>}, {pipeline_mode = #tpu.pipeline_mode<synchronous>, transform_indices = @transform_6, window_bounds = array<i64: 1, 128>}, {transform_indices = @transform_7, window_bounds = array<i64: 16, 128>}]} {
    %c0 = arith.constant 0 : index
    %c0_0 = arith.constant 0 : index
    %0 = vector.load %arg1[%c0, %c0_0] : memref<16x128xf32, #tpu.memory_space<vmem>>, vector<16x128xf32>
    %cst = arith.constant dense<0.000000e+00> : vector<16xf32>
    %1 = vector.multi_reduction <add>, %0, %cst [1] : vector<16x128xf32> to vector<16xf32>
    %2 = vector.shape_cast %1 : vector<16xf32> to vector<16x1xf32>
    %cst_1 = arith.constant 3.125000e-02 : f32
    %3 = vector.broadcast %cst_1 : f32 to vector<16x1xf32>
    %4 = arith.mulf %2, %3 : vector<16x1xf32>
    %5 = vector.broadcast %4 : vector<16x1xf32> to vector<16x128xf32>
    %6 = arith.subf %0, %5 : vector<16x128xf32>
    %7 = tpu.iota {dimensions = array<i32: 1>} : vector<16x128xi32>
    %c32_i32 = arith.constant 32 : i32
    %8 = vector.broadcast %c32_i32 : i32 to vector<16x128xi32>
    %9 = arith.cmpi slt, %7, %8 : vector<16x128xi32>
    %cst_2 = arith.constant 0.000000e+00 : f32
    %10 = vector.broadcast %cst_2 : f32 to vector<16x128xf32>
    %11 = arith.select %9, %6, %10 : vector<16x128xi1>, vector<16x128xf32>
    %12 = arith.mulf %11, %11 : vector<16x128xf32>
    %cst_3 = arith.constant dense<0.000000e+00> : vector<16xf32>
    %13 = vector.multi_reduction <add>, %12, %cst_3 [1] : vector<16x128xf32> to vector<16xf32>
    %14 = vector.shape_cast %13 : vector<16xf32> to vector<16x1xf32>
    %cst_4 = arith.constant 3.125000e-02 : f32
    %15 = vector.broadcast %cst_4 : f32 to vector<16x1xf32>
    %16 = arith.mulf %14, %15 : vector<16x1xf32>
    %cst_5 = arith.constant 9.99999974E-6 : f32
    %17 = vector.broadcast %cst_5 : f32 to vector<16x1xf32>
    %18 = arith.addf %16, %17 : vector<16x1xf32>
    %19 = math.rsqrt %18 : vector<16x1xf32>
    %20 = vector.broadcast %19 : vector<16x1xf32> to vector<16x128xf32>
    %21 = arith.mulf %6, %20 : vector<16x128xf32>
    %c0_6 = arith.constant 0 : index
    %c0_7 = arith.constant 0 : index
    %22 = vector.load %arg2[%c0_6, %c0_7] : memref<1x128xf32, #tpu.memory_space<vmem>>, vector<1x128xf32>
    %23 = vector.broadcast %22 : vector<1x128xf32> to vector<16x128xf32>
    %24 = arith.mulf %21, %23 : vector<16x128xf32>
    %c0_8 = arith.constant 0 : index
    %c0_9 = arith.constant 0 : index
    %25 = vector.load %arg3[%c0_8, %c0_9] : memref<1x128xf32, #tpu.memory_space<vmem>>, vector<1x128xf32>
    %26 = vector.broadcast %25 : vector<1x128xf32> to vector<16x128xf32>
    %27 = arith.addf %24, %26 : vector<16x128xf32>
    %c0_10 = arith.constant 0 : index
    %c0_11 = arith.constant 0 : index
    %28 = vector.load %arg4[%c0_10, %c0_11] : memref<128x128xf32, #tpu.memory_space<vmem>>, vector<128x128xf32>
    %cst_12 = arith.constant dense<0.000000e+00> : vector<16x128xf32>
    %29 = tpu.matmul %27, %28, %cst_12 {dimension_numbers = #tpu.dot_dimension_numbers<[1], [0], [0], [1], [0, 0, 1, 1], [], []>} : vector<16x128xf32>, vector<128x128xf32>, vector<16x128xf32> -> vector<16x128xf32>
    %c0_13 = arith.constant 0 : index
    %c0_14 = arith.constant 0 : index
    %30 = vector.load %arg5[%c0_13, %c0_14] : memref<1x128xf32, #tpu.memory_space<vmem>>, vector<1x128xf32>
    %31 = vector.broadcast %30 : vector<1x128xf32> to vector<16x128xf32>
    %32 = arith.addf %29, %31 : vector<16x128xf32>
    %cst_15 = arith.constant 0.000000e+00 : f32
    %33 = vector.broadcast %cst_15 : f32 to vector<16x128xf32>
    %34 = arith.maximumf %32, %33 : vector<16x128xf32>
    %c0_16 = arith.constant 0 : index
    %c0_17 = arith.constant 0 : index
    %35 = vector.load %arg6[%c0_16, %c0_17] : memref<128x128xf32, #tpu.memory_space<vmem>>, vector<128x128xf32>
    %cst_18 = arith.constant dense<0.000000e+00> : vector<16x128xf32>
    %36 = tpu.matmul %34, %35, %cst_18 {dimension_numbers = #tpu.dot_dimension_numbers<[1], [0], [0], [1], [0, 0, 1, 1], [], []>} : vector<16x128xf32>, vector<128x128xf32>, vector<16x128xf32> -> vector<16x128xf32>
    %c0_19 = arith.constant 0 : index
    %c0_20 = arith.constant 0 : index
    %37 = vector.load %arg7[%c0_19, %c0_20] : memref<1x128xf32, #tpu.memory_space<vmem>>, vector<1x128xf32>
    %38 = vector.broadcast %37 : vector<1x128xf32> to vector<16x128xf32>
    %39 = arith.addf %36, %38 : vector<16x128xf32>
    %40 = arith.addf %39, %0 : vector<16x128xf32>
    %c0_21 = arith.constant 0 : index
    %c0_22 = arith.constant 0 : index
    %41 = vector.load %arg8[%c0_21, %c0_22] : memref<16x128xf32, #tpu.memory_space<vmem>>, vector<16x128xf32>
    tpu.vector_store %arg8[%c0_21, %c0_22], %40 {strides = array<i32>} : memref<16x128xf32, #tpu.memory_space<vmem>>, vector<16x128xf32>,
    return
  }
  func.func @transform_0(%arg0: i32) -> (i32, i32) {
    %c0_i32 = arith.constant 0 : i32
    %c0_i32_0 = arith.constant 0 : i32
    return %arg0, %c0_i32 : i32, i32
  }
  func.func @transform_1(%arg0: i32) -> (i32, i32) {
    %c0_i32 = arith.constant 0 : i32
    %c0_i32_0 = arith.constant 0 : i32
    %c0_i32_1 = arith.constant 0 : i32
    return %c0_i32, %c0_i32_0 : i32, i32
  }
  func.func @transform_2(%arg0: i32) -> (i32, i32) {
    %c0_i32 = arith.constant 0 : i32
    %c0_i32_0 = arith.constant 0 : i32
    %c0_i32_1 = arith.constant 0 : i32
    return %c0_i32, %c0_i32_0 : i32, i32
  }
  func.func @transform_3(%arg0: i32) -> (i32, i32) {
    %c0_i32 = arith.constant 0 : i32
    %c0_i32_0 = arith.constant 0 : i32
    %c0_i32_1 = arith.constant 0 : i32
    return %c0_i32, %c0_i32_0 : i32, i32
  }
  func.func @transform_4(%arg0: i32) -> (i32, i32) {
    %c0_i32 = arith.constant 0 : i32
    %c0_i32_0 = arith.constant 0 : i32
    %c0_i32_1 = arith.constant 0 : i32
    return %c0_i32, %c0_i32_0 : i32, i32
  }
  func.func @transform_5(%arg0: i32) -> (i32, i32) {
    %c0_i32 = arith.constant 0 : i32
    %c0_i32_0 = arith.constant 0 : i32
    %c0_i32_1 = arith.constant 0 : i32
    return %c0_i32, %c0_i32_0 : i32, i32
  }
  func.func @transform_6(%arg0: i32) -> (i32, i32) {
    %c0_i32 = arith.constant 0 : i32
    %c0_i32_0 = arith.constant 0 : i32
    %c0_i32_1 = arith.constant 0 : i32
    return %c0_i32, %c0_i32_0 : i32, i32
  }
  func.func @transform_7(%arg0: i32) -> (i32, i32) {
    %c0_i32 = arith.constant 0 : i32
    %c0_i32_0 = arith.constant 0 : i32
    return %arg0, %c0_i32 : i32, i32
  }
}

</mosaic_0001>

<llo_original>
// kernel: tpu_custom_call.1
$region0: #{tpu_custom_call.1}
  #allocation0 [shape = 'u32[]', space=smem, size = 0x4, offset = 0x4, fixed_abs, tag = 'smem constant byte address 0x4 - core index']
  #allocation1 [shape = 'u32[72,128]{1,0:T(1,128)}', space=vmem, size = 0x9000, scoped, tag = 'internal scratch']
  %s0 = inlined_call_operand.hbm [shape: f32[16,128], index: 0, kind: input, shape index: {}]
  %s1 = inlined_call_operand.hbm [shape: f32[1,128], index: 1, kind: input, shape index: {}]
  %s2 = inlined_call_operand.vmem [shape: f32[1,128], index: 2, kind: input, shape index: {}]
  %s3 = inlined_call_operand.hbm [shape: f32[128,128], index: 3, kind: input, shape index: {}]
  %s4 = inlined_call_operand.vmem [shape: f32[1,128], index: 4, kind: input, shape index: {}]
  %s5 = inlined_call_operand.hbm [shape: f32[128,128], index: 5, kind: input, shape index: {}]
  %s6 = inlined_call_operand.vmem [shape: f32[1,128], index: 6, kind: input, shape index: {}]
  %s7 = inlined_call_operand.hbm [shape: f32[16,128], index: 7, kind: output, shape index: {}]
  %s8 = sld [smem:[#allocation0]]
  $region54: #{tpu_custom_call.1} parent=0
    _
  %s10 = ssub.s32 1, %s8
  %s11 = scalar_select 0, %s10, %s8
  $region1: #{tpu_custom_call.1} parent=0
    #allocation2 [shape = 'u8[8192]{0}', space=vmem, size = 0x2000, scoped, tag = 'input window, operand 0, single buffered']
    #allocation3 [shape = 's32[1]{0}', space=sflag, size = 0x4, scoped, tag = 'scoped memory for tpu_custom_call.1']
    #allocation4 [shape = 's32[1]{0}', space=sflag, size = 0x4, scoped, tag = 'scoped memory for tpu_custom_call.1']
    #allocation5 [shape = 'u8[512]{0}', space=vmem, size = 0x400, scoped, tag = 'input window, operand 1, single buffered']
    #allocation6 [shape = 's32[1]{0}', space=sflag, size = 0x4, scoped, tag = 'scoped memory for tpu_custom_call.1']
    #allocation7 [shape = 'u8[65536]{0}', space=vmem, size = 0x10000, scoped, tag = 'input window, operand 3, single buffered']
    #allocation8 [shape = 'u8[65536]{0}', space=vmem, size = 0x10000, scoped, tag = 'input window, operand 5, single buffered']
    #allocation9 [shape = 's32[1]{0}', space=sflag, size = 0x4, scoped, tag = 'scoped memory for tpu_custom_call.1']
    #allocation10 [shape = 'u8[8192]{0}', space=vmem, size = 0x2000, scoped, tag = 'output window, operand 0, single buffered']
    %12 = vsyncpa [#allocation3], 0
    %13 = vsyncpa [#allocation6], 0
    %14 = vsyncpa [#allocation9], 0
    %15 = vsyncpa [#allocation4], 0
    // Predicated region
    $region2: #{tpu_custom_call.1} parent=1 // pred_check
      _
    $region3: #{tpu_custom_call.1} parent=1 // pred_check_branch
      %17 = sbr.rel (0) target = $region5
    $region4: #{tpu_custom_call.1} parent=1 // pred_region
      %19 = vsyncadd [#allocation3], 0
      %s20 = sshll.u32 %s0, 4
      %s21 = int_to_ptr.hbm [resolvable:$true] %s20
      %s22 = sshll.u32 [#allocation2], 4
      %s23 = int_to_ptr.vmem [resolvable:$true] %s22
      %28 = dma.hbm_to_vmem [thread:$0]  %s21, 256, %s23, [#allocation3], 128, 128, 8
    $region5: #{tpu_custom_call.1} parent=1 // pred_fallthru
      _
    // Predicated region
    $region6: #{tpu_custom_call.1} parent=1 // pred_check
      _
    $region7: #{tpu_custom_call.1} parent=1 // pred_check_branch
      %30 = sbr.rel (0) target = $region9
    $region8: #{tpu_custom_call.1} parent=1 // pred_region
      %32 = vsyncadd [#allocation6], 0
      %s34 = sshll.u32 %s1, 4
      %s35 = int_to_ptr.hbm [resolvable:$true] %s34
      %s36 = sshll.u32 [#allocation5], 4
      %s37 = int_to_ptr.vmem [resolvable:$true] %s36
      %39 = dma.hbm_to_vmem [thread:$0]  %s35, 16, %s37, [#allocation6]
    $region9: #{tpu_custom_call.1} parent=1 // pred_fallthru
      _
    // Predicated region
    $region10: #{tpu_custom_call.1} parent=1 // pred_check
      _
    $region11: #{tpu_custom_call.1} parent=1 // pred_check_branch
      %41 = sbr.rel (0) target = $region13
    $region12: #{tpu_custom_call.1} parent=1 // pred_region
      _
    $region13: #{tpu_custom_call.1} parent=1 // pred_fallthru
      _
    // Predicated region
    $region14: #{tpu_custom_call.1} parent=1 // pred_check
      _
    $region15: #{tpu_custom_call.1} parent=1 // pred_check_branch
      %43 = sbr.rel (0) target = $region17
    $region16: #{tpu_custom_call.1} parent=1 // pred_region
      %45 = vsyncadd [#allocation6], 0
      %s46 = sshll.u32 %s3, 4
      %s47 = int_to_ptr.hbm [resolvable:$true] %s46
      %s48 = sshll.u32 [#allocation7], 4
      %s49 = int_to_ptr.vmem [resolvable:$true] %s48
      %54 = dma.hbm_to_vmem [thread:$0]  %s47, 2048, %s49, [#allocation6], 128, 128, 8
    $region17: #{tpu_custom_call.1} parent=1 // pred_fallthru
      _
    // Predicated region
    $region18: #{tpu_custom_call.1} parent=1 // pred_check
      _
    $region19: #{tpu_custom_call.1} parent=1 // pred_check_branch
      %56 = sbr.rel (0) target = $region21
    $region20: #{tpu_custom_call.1} parent=1 // pred_region
      _
    $region21: #{tpu_custom_call.1} parent=1 // pred_fallthru
      _
    // Predicated region
    $region22: #{tpu_custom_call.1} parent=1 // pred_check
      _
    $region23: #{tpu_custom_call.1} parent=1 // pred_check_branch
      %58 = sbr.rel (0) target = $region25
    $region24: #{tpu_custom_call.1} parent=1 // pred_region
      %60 = vsyncadd [#allocation9], 0
      %s61 = sshll.u32 %s5, 4
      %s62 = int_to_ptr.hbm [resolvable:$true] %s61
      %s63 = sshll.u32 [#allocation8], 4
      %s64 = int_to_ptr.vmem [resolvable:$true] %s63
      %69 = dma.hbm_to_vmem [thread:$0]  %s62, 2048, %s64, [#allocation9], 128, 128, 8
    $region25: #{tpu_custom_call.1} parent=1 // pred_fallthru
      _
    // Predicated region
    $region26: #{tpu_custom_call.1} parent=1 // pred_check
      _
    $region27: #{tpu_custom_call.1} parent=1 // pred_check_branch
      %71 = sbr.rel (0) target = $region29
    $region28: #{tpu_custom_call.1} parent=1 // pred_region
      _
    $region29: #{tpu_custom_call.1} parent=1 // pred_fallthru
      _
    // Predicated region
    $region30: #{tpu_custom_call.1} parent=1 // pred_check
      _
    $region31: #{tpu_custom_call.1} parent=1 // pred_check_branch
      %73 = sbr.rel (0) target = $region33
    $region32: #{tpu_custom_call.1} parent=1 // pred_region
      %75 = dma.done [#allocation3], 256
    $region33: #{tpu_custom_call.1} parent=1 // pred_fallthru
      _
    // Predicated region
    $region34: #{tpu_custom_call.1} parent=1 // pred_check
      _
    $region35: #{tpu_custom_call.1} parent=1 // pred_check_branch
      %77 = sbr.rel (0) target = $region37
    $region36: #{tpu_custom_call.1} parent=1 // pred_region
      %79 = dma.done [#allocation6], 16
    $region37: #{tpu_custom_call.1} parent=1 // pred_fallthru
      _
    // Predicated region
    $region38: #{tpu_custom_call.1} parent=1 // pred_check
      _
    $region39: #{tpu_custom_call.1} parent=1 // pred_check_branch
      %81 = sbr.rel (0) target = $region41
    $region40: #{tpu_custom_call.1} parent=1 // pred_region
      %83 = dma.done [#allocation6], 2048
    $region41: #{tpu_custom_call.1} parent=1 // pred_fallthru
      _
    // Predicated region
    $region42: #{tpu_custom_call.1} parent=1 // pred_check
      _
    $region43: #{tpu_custom_call.1} parent=1 // pred_check_branch
      %85 = sbr.rel (0) target = $region45
    $region44: #{tpu_custom_call.1} parent=1 // pred_region
      %87 = dma.done [#allocation9], 2048
    $region45: #{tpu_custom_call.1} parent=1 // pred_fallthru
      _
    %v88 = vld [vmem:[#allocation2] sm:$0xff]
    %v89 = vld [vmem:[#allocation2 + $0x8] sm:$0xff]
    %90 = vadd.xlane.f32.xlu0 %v88
    %v91 = vpop.xlane.xlu0 %90
    %92 = vadd.xlane.f32.xlu0 %v89
    %v93 = vpop.xlane.xlu0 %92
    %v94 = vmul.f32 %v91, 0.03125
    %v95 = vmul.f32 %v93, 0.03125
    %v96 = vsub.f32 %v88, %v94
    %v97 = vsub.f32 %v89, %v95
    %v98 = vlaneseq
    %v99 = vand.u32 %v98, 127
    %vm100 = vcmp.lt.s32.totalorder %v99, 32
    %v101 = vsel %vm100, %v96, 0.0
    %v102 = vsel %vm100, %v97, 0.0
    %v103 = vmul.f32 %v101, %v101
    %v104 = vmul.f32 %v102, %v102
    %105 = vadd.xlane.f32.xlu0 %v103
    %v106 = vpop.xlane.xlu0 %105
    %107 = vadd.xlane.f32.xlu0 %v104
    %v108 = vpop.xlane.xlu0 %107
    %v109 = vmul.f32 %v106, 0.03125
    %v110 = vmul.f32 %v108, 0.03125
    %v111 = vadd.f32 %v109, 1e-05
    %v112 = vadd.f32 %v110, 1e-05
    %v113 = vrsqrt.pop %v111
    %v114 = vmul.f32 %v113, %v111
    %v115 = vmul.f32 %v114, %v113
    %v116 = vmul.f32 0.5, %v115
    %v117 = vsub.f32 1.5, %v116
    %v118 = vmul.f32 %v113, %v117
    %vm119 = vweird.f32 %v111
    %vm120 = vweird.f32 %v113
    %vm121 = vmor %vm119, %vm120
    %v122 = vsel %vm121, %v113, %v118
    %v123 = vrsqrt.pop %v112
    %v124 = vmul.f32 %v123, %v112
    %v125 = vmul.f32 %v124, %v123
    %v126 = vmul.f32 0.5, %v125
    %v127 = vsub.f32 1.5, %v126
    %v128 = vmul.f32 %v123, %v127
    %vm129 = vweird.f32 %v112
    %vm130 = vweird.f32 %v123
    %vm131 = vmor %vm129, %vm130
    %v132 = vsel %vm131, %v123, %v128
    %v133 = vmul.f32 %v96, %v122
    %v134 = vmul.f32 %v97, %v132
    %v135 = vld [vmem:[#allocation5] sm:$0x1]
    %v137 = vperm.slane %v135, 0
    %v139 = vmul.f32 %v133, %v137
    %v140 = vmul.f32 %v134, %v137
    %v141 = vld [vmem:[%s2] sm:$0x1]
    %v143 = vperm.slane %v141, 0
    %v145 = vadd.f32 %v139, %v143
    %v146 = vadd.f32 %v140, %v143
    %v147 = vld [vmem:[#allocation7] sm:$0xff]
    %v148 = vld [vmem:[#allocation7 + $0x8] sm:$0xff]
    %v149 = vld [vmem:[#allocation7 + $0x10] sm:$0xff]
    %v150 = vld [vmem:[#allocation7 + $0x18] sm:$0xff]
    %v151 = vld [vmem:[#allocation7 + $0x20] sm:$0xff]
    %v152 = vld [vmem:[#allocation7 + $0x28] sm:$0xff]
    %v153 = vld [vmem:[#allocation7 + $0x30] sm:$0xff]
    %v154 = vld [vmem:[#allocation7 + $0x38] sm:$0xff]
    %v155 = vld [vmem:[#allocation7 + $0x40] sm:$0xff]
    %v156 = vld [vmem:[#allocation7 + $0x48] sm:$0xff]
    %v157 = vld [vmem:[#allocation7 + $0x50] sm:$0xff]
    %v158 = vld [vmem:[#allocation7 + $0x58] sm:$0xff]
    %v159 = vld [vmem:[#allocation7 + $0x60] sm:$0xff]
    %v160 = vld [vmem:[#allocation7 + $0x68] sm:$0xff]
    %v161 = vld [vmem:[#allocation7 + $0x70] sm:$0xff]
    %v162 = vld [vmem:[#allocation7 + $0x78] sm:$0xff]
    %v163 = vld [vmem:[%s4] sm:$0x1]
    %v165 = vperm.slane %v163, 0
    %167 = vmatpush.msra.mxu0 %v162
    %168 = vmatpush.msra.mxu0 %v161
    %169 = vmatpush.msra.mxu0 %v160
    %170 = vmatpush.msra.mxu0 %v159
    %171 = vmatpush.msra.mxu0 %v158
    %172 = vmatpush.msra.mxu0 %v157
    %173 = vmatpush.msra.mxu0 %v156
    %174 = vmatpush.msra.mxu0 %v155
    %175 = vmatpush.msra.mxu0 %v154
    %176 = vmatpush.msra.mxu0 %v153
    %177 = vmatpush.msra.mxu0 %v152
    %178 = vmatpush.msra.mxu0 %v151
    %179 = vmatpush.msra.mxu0 %v150
    %180 = vmatpush.msra.mxu0 %v149
    %181 = vmatpush.msra.mxu0 %v148
    %182 = vmatpush.msra.mxu0 %v147
    %183 = vmatmul.f32.gmra.mxu0 %v145
    %v184 = vpop.f32.mrf.mxu0
    %v185 = vadd.f32 %v165, %v184
    %186 = vmatmul.f32.gmra.mxu0 %v146
    %v187 = vpop.f32.mrf.mxu0
    %v188 = vadd.f32 %v165, %v187
    %189 = vdwg.mxu0
    %v190 = vmax.f32 %v185, 0.0
    %v191 = vmax.f32 %v188, 0.0
    %v192 = vld [vmem:[#allocation8] sm:$0xff]
    %v193 = vld [vmem:[#allocation8 + $0x8] sm:$0xff]
    %v194 = vld [vmem:[#allocation8 + $0x10] sm:$0xff]
    %v195 = vld [vmem:[#allocation8 + $0x18] sm:$0xff]
    %v196 = vld [vmem:[#allocation8 + $0x20] sm:$0xff]
    %v197 = vld [vmem:[#allocation8 + $0x28] sm:$0xff]
    %v198 = vld [vmem:[#allocation8 + $0x30] sm:$0xff]
    %v199 = vld [vmem:[#allocation8 + $0x38] sm:$0xff]
    %v200 = vld [vmem:[#allocation8 + $0x40] sm:$0xff]
    %v201 = vld [vmem:[#allocation8 + $0x48] sm:$0xff]
    %v202 = vld [vmem:[#allocation8 + $0x50] sm:$0xff]
    %v203 = vld [vmem:[#allocation8 + $0x58] sm:$0xff]
    %v204 = vld [vmem:[#allocation8 + $0x60] sm:$0xff]
    %v205 = vld [vmem:[#allocation8 + $0x68] sm:$0xff]
    %v206 = vld [vmem:[#allocation8 + $0x70] sm:$0xff]
    %v207 = vld [vmem:[#allocation8 + $0x78] sm:$0xff]
    %v208 = vld [vmem:[%s6] sm:$0x1]
    %v210 = vperm.slane %v208, 0
    %212 = vmatpush.msra.mxu0 %v207
    %213 = vmatpush.msra.mxu0 %v206
    %214 = vmatpush.msra.mxu0 %v205
    %215 = vmatpush.msra.mxu0 %v204
    %216 = vmatpush.msra.mxu0 %v203
    %217 = vmatpush.msra.mxu0 %v202
    %218 = vmatpush.msra.mxu0 %v201
    %219 = vmatpush.msra.mxu0 %v200
    %220 = vmatpush.msra.mxu0 %v199
    %221 = vmatpush.msra.mxu0 %v198
    %222 = vmatpush.msra.mxu0 %v197
    %223 = vmatpush.msra.mxu0 %v196
    %224 = vmatpush.msra.mxu0 %v195
    %225 = vmatpush.msra.mxu0 %v194
    %226 = vmatpush.msra.mxu0 %v193
    %227 = vmatpush.msra.mxu0 %v192
    %228 = vmatmul.f32.gmra.mxu0 %v190
    %v229 = vpop.f32.mrf.mxu0
    %v230 = vadd.f32 %v210, %v229
    %231 = vmatmul.f32.gmra.mxu0 %v191
    %v232 = vpop.f32.mrf.mxu0
    %v233 = vadd.f32 %v210, %v232
    %234 = vdwg.mxu0
    %v235 = vadd.f32 %v230, %v88
    %v236 = vadd.f32 %v233, %v89
    %237 = vst [vmem:[#allocation10] sm:$0xff] %v235
    %238 = vst [vmem:[#allocation10 + $0x8] sm:$0xff] %v236
    // Predicated region
    $region46: #{tpu_custom_call.1} parent=1 // pred_check
      _
    $region47: #{tpu_custom_call.1} parent=1 // pred_check_branch
      %240 = sbr.rel (0) target = $region49
    $region48: #{tpu_custom_call.1} parent=1 // pred_region
      %242 = vsyncadd [#allocation4], 0
      %s243 = sshll.u32 [#allocation10], 4
      %s244 = int_to_ptr.vmem [resolvable:$true] %s243
      %s245 = sshll.u32 %s7, 4
      %s246 = int_to_ptr.hbm [resolvable:$true] %s245
      %251 = dma.vmem_to_hbm [thread:$0]  %s244, 256, %s246, [#allocation4], 128, 128, 8
    $region49: #{tpu_custom_call.1} parent=1 // pred_fallthru
      _
    // Predicated region
    $region50: #{tpu_custom_call.1} parent=1 // pred_check
      _
    $region51: #{tpu_custom_call.1} parent=1 // pred_check_branch
      %253 = sbr.rel (0) target = $region53
    $region52: #{tpu_custom_call.1} parent=1 // pred_region
      %255 = dma.done [#allocation4], 256
    $region53: #{tpu_custom_call.1} parent=1 // pred_fallthru
      _
    %256 = vsyncpa [#allocation3], 1
    %257 = vsyncpa [#allocation6], 1
    %258 = vsyncpa [#allocation9], 1
    %259 = vsyncpa [#allocation4], 1

</llo_original>
